<compile_context>
chip_gen: v7x
topology: tpu7x:2x2x1
jax: 0.10.0
libtpu: 0.0.40
codegen_flags: <defaults>
</compile_context>

<pallas_src>
import jax
import jax.numpy as jnp
from jax.experimental import pallas as pl
from jax.experimental.pallas import tpu as pltpu


def fm_kernel(x_ref, factor_ref, bias_ref, sqnorm_ref, out_ref):
    # x_ref      : (F, tb)   int32  -- transposed feature indices (samples on lanes)
    # factor_ref : (L, N)           -- transposed latent-factor table (VMEM resident)
    # bias_ref   : (N, 1)           -- bias table
    # sqnorm_ref : (N, 1)    f32    -- per-feature ||v_j||^2 (precomputed, tiny)
    # out_ref    : (1, tb)   f32    -- lane-dense output row
    idx = x_ref[...]                                   # (F, tb) int32
    num_fields, tb = idx.shape
    feature_num = bias_ref.shape[0]

    # counts[j, b] = number of occurrences of feature j among sample b's fields.
    iota_n = jax.lax.broadcasted_iota(jnp.int32, (feature_num, tb), 0)   # sublane iota
    counts = jnp.zeros((feature_num, tb), jnp.float32)
    for f in range(num_fields):                        # static unroll, num_fields is small
        counts = counts + (iota_n == idx[f : f + 1, :]).astype(jnp.float32)

    # Field-sum of latent factors via the MXU: (L, N) @ (N, tb) -> (L, tb).
    fac = factor_ref[...].astype(jnp.float32)
    s = jnp.dot(fac, counts, preferred_element_type=jnp.float32)         # (L, tb)

    # Bias sum and sum of per-field squared norms: exact f32 VPU weighted reduces.
    bias_tot = jnp.sum(bias_ref[...].astype(jnp.float32) * counts,
                       axis=0, keepdims=True)                            # (1, tb)
    sq_tot = jnp.sum(sqnorm_ref[...] * counts, axis=0, keepdims=True)    # (1, tb)

    # FM interaction, identical math to torch: sum_f <v_f, S - v_f>.
    inter = jnp.sum(s * s, axis=0, keepdims=True) - sq_tot               # (1, tb)
    out_ref[...] = (bias_tot + inter).astype(out_ref.dtype)


def factorization_machine(x_idx, emb_bias_w, emb_factor_w, *, tb=512):
    """Pallas-backed equivalent of FactorizationMachine.forward.

    x_idx        : (B, F) int32 feature indices
    emb_bias_w   : (feature_num, 1)  (any float dtype; bf16 recommended)
    emb_factor_w : (feature_num, L)  (any float dtype; bf16 recommended)
    returns      : (B, 1) float32
    """
    B, F = x_idx.shape
    N, L = emb_factor_w.shape

    # Lane-dense batch tile (multiple of 128); shrink for small batches.
    tb = max(128, (tb // 128) * 128)
    if B <= tb:
        tb = ((B + 127) // 128) * 128
    B_pad = pl.cdiv(B, tb) * tb

    # Layout plumbing in plain JAX (cheap): pad batch, put samples on lanes.
    x_pad = jnp.pad(x_idx.astype(jnp.int32), ((0, B_pad - B), (0, 0)))   # pad rows -> index 0
    x_t = x_pad.T                                                        # (F, B_pad)
    factor_t = emb_factor_w.T                                            # (L, N), storage dtype
    sqnorm = jnp.sum(jnp.square(emb_factor_w.astype(jnp.float32)),
                     axis=1, keepdims=True)                              # (N, 1) f32

    grid = (B_pad // tb,)
    out_row = pl.pallas_call(
        fm_kernel,
        out_shape=jax.ShapeDtypeStruct((1, B_pad), jnp.float32),
        grid=grid,
        in_specs=[
            pl.BlockSpec((F, tb), lambda i: (0, i)),     # index tile (only per-tile HBM stream)
            pl.BlockSpec((L, N), lambda i: (0, 0)),      # factor table, VMEM resident
            pl.BlockSpec((N, 1), lambda i: (0, 0)),      # bias table
            pl.BlockSpec((N, 1), lambda i: (0, 0)),      # per-feature squared norms
        ],
        out_specs=pl.BlockSpec((1, tb), lambda i: (0, i)),   # lane-dense output block
        compiler_params=pltpu.CompilerParams(
            dimension_semantics=("parallel",),           # shard tiles across TCs on v7x
        ),
    )(x_t, factor_t, emb_bias_w, sqnorm)

    return out_row[0, :B].reshape(B, 1)


def factorization_machine_ref(x_idx, emb_bias_w, emb_factor_w):
    """Pure-JAX reference mirroring the PyTorch forward exactly."""
    bias_w = emb_bias_w.astype(jnp.float32)
    factor_w = emb_factor_w.astype(jnp.float32)
    bias = jnp.sum(bias_w[x_idx], axis=(-1, -2)).reshape(-1, 1)          # (B, 1)
    factor = factor_w[x_idx]                                             # (B, F, L)
    diff = jnp.sum(factor, axis=1, keepdims=True) - factor
    dot = jnp.sum(factor * diff, axis=-1)                                # (B, F)
    return bias + jnp.sum(dot, axis=-1, keepdims=True)                   # (B, 1)


if __name__ == "__main__":
    feature_num = 32
    latent_num = 16
    num_fields = 8
    batch = 200          # deliberately NOT a tile multiple: exercises pad + multi-tile grid

    key = jax.random.PRNGKey(0)
    k_bias, k_factor, k_idx = jax.random.split(key, 3)

    # nn.Embedding-style N(0,1) init, stored in bf16 (kernel upcasts to f32).
    emb_bias_w = jax.random.normal(k_bias, (feature_num, 1),
                                   dtype=jnp.float32).astype(jnp.bfloat16)
    emb_factor_w = jax.random.normal(k_factor, (feature_num, latent_num),
                                     dtype=jnp.float32).astype(jnp.bfloat16)

    # Integer feature indices, like the PyTorch Embedding input.
    x = jax.random.randint(k_idx, (batch, num_fields), 0, feature_num, dtype=jnp.int32)

    out = factorization_machine(x, emb_bias_w, emb_factor_w, tb=128)   # grid of 2 tiles
    out = jax.block_until_ready(out)

    ref = factorization_machine_ref(x, emb_bias_w, emb_factor_w)
    assert out.shape == (batch, 1)
    assert jnp.allclose(out, ref, atol=2e-3, rtol=2e-3), (out, ref)

    print("KERNEL_OK")
</pallas_src>

<mosaic_0001>
module attributes {stable_mosaic.version = 11 : i64} {
  func.func @fm_kernel(%arg0: i32, %arg1: memref<8x128xi32, #tpu.memory_space<vmem>>, %arg2: memref<16x32xbf16, #tpu.memory_space<vmem>>, %arg3: memref<32x1xbf16, #tpu.memory_space<vmem>>, %arg4: memref<32x1xf32, #tpu.memory_space<vmem>>, %arg5: memref<1x128xf32, #tpu.memory_space<vmem>>) attributes {dimension_semantics = [#tpu.dimension_semantics<parallel>], iteration_bounds = array<i64: 2>, scalar_prefetch = 0 : i64, scratch_operands = 0 : i64, tpu.core_type = #tpu.core_type<tc>, window_params = [{transform_indices = @transform_0, window_bounds = array<i64: 8, 128>}, {pipeline_mode = #tpu.pipeline_mode<synchronous>, transform_indices = @transform_1, window_bounds = array<i64: 16, 32>}, {pipeline_mode = #tpu.pipeline_mode<synchronous>, transform_indices = @transform_2, window_bounds = array<i64: 32, 1>}, {pipeline_mode = #tpu.pipeline_mode<synchronous>, transform_indices = @transform_3, window_bounds = array<i64: 32, 1>}, {transform_indices = @transform_4, window_bounds = array<i64: 1, 128>}]} {
    %c0 = arith.constant 0 : index
    %c0_0 = arith.constant 0 : index
    %0 = vector.load %arg1[%c0, %c0_0] : memref<8x128xi32, #tpu.memory_space<vmem>>, vector<8x128xi32>
    %1 = tpu.iota {dimensions = array<i32: 0>} : vector<32x128xi32>
    %cst = arith.constant 0.000000e+00 : f32
    %2 = vector.broadcast %cst : f32 to vector<32x128xf32>
    %3 = vector.extract_strided_slice %0 {offsets = [0, 0], sizes = [1, 128], strides = [1, 1]} : vector<8x128xi32> to vector<1x128xi32>
    %4 = vector.broadcast %3 : vector<1x128xi32> to vector<32x128xi32>
    %5 = arith.cmpi eq, %1, %4 : vector<32x128xi32>
    %6 = arith.extui %5 : vector<32x128xi1> to vector<32x128xi32>
    %7 = arith.sitofp %6 : vector<32x128xi32> to vector<32x128xf32>
    %8 = arith.addf %2, %7 : vector<32x128xf32>
    %9 = vector.extract_strided_slice %0 {offsets = [1, 0], sizes = [1, 128], strides = [1, 1]} : vector<8x128xi32> to vector<1x128xi32>
    %10 = vector.broadcast %9 : vector<1x128xi32> to vector<32x128xi32>
    %11 = arith.cmpi eq, %1, %10 : vector<32x128xi32>
    %12 = arith.extui %11 : vector<32x128xi1> to vector<32x128xi32>
    %13 = arith.sitofp %12 : vector<32x128xi32> to vector<32x128xf32>
    %14 = arith.addf %8, %13 : vector<32x128xf32>
    %15 = vector.extract_strided_slice %0 {offsets = [2, 0], sizes = [1, 128], strides = [1, 1]} : vector<8x128xi32> to vector<1x128xi32>
    %16 = vector.broadcast %15 : vector<1x128xi32> to vector<32x128xi32>
    %17 = arith.cmpi eq, %1, %16 : vector<32x128xi32>
    %18 = arith.extui %17 : vector<32x128xi1> to vector<32x128xi32>
    %19 = arith.sitofp %18 : vector<32x128xi32> to vector<32x128xf32>
    %20 = arith.addf %14, %19 : vector<32x128xf32>
    %21 = vector.extract_strided_slice %0 {offsets = [3, 0], sizes = [1, 128], strides = [1, 1]} : vector<8x128xi32> to vector<1x128xi32>
    %22 = vector.broadcast %21 : vector<1x128xi32> to vector<32x128xi32>
    %23 = arith.cmpi eq, %1, %22 : vector<32x128xi32>
    %24 = arith.extui %23 : vector<32x128xi1> to vector<32x128xi32>
    %25 = arith.sitofp %24 : vector<32x128xi32> to vector<32x128xf32>
    %26 = arith.addf %20, %25 : vector<32x128xf32>
    %27 = vector.extract_strided_slice %0 {offsets = [4, 0], sizes = [1, 128], strides = [1, 1]} : vector<8x128xi32> to vector<1x128xi32>
    %28 = vector.broadcast %27 : vector<1x128xi32> to vector<32x128xi32>
    %29 = arith.cmpi eq, %1, %28 : vector<32x128xi32>
    %30 = arith.extui %29 : vector<32x128xi1> to vector<32x128xi32>
    %31 = arith.sitofp %30 : vector<32x128xi32> to vector<32x128xf32>
    %32 = arith.addf %26, %31 : vector<32x128xf32>
    %33 = vector.extract_strided_slice %0 {offsets = [5, 0], sizes = [1, 128], strides = [1, 1]} : vector<8x128xi32> to vector<1x128xi32>
    %34 = vector.broadcast %33 : vector<1x128xi32> to vector<32x128xi32>
    %35 = arith.cmpi eq, %1, %34 : vector<32x128xi32>
    %36 = arith.extui %35 : vector<32x128xi1> to vector<32x128xi32>
    %37 = arith.sitofp %36 : vector<32x128xi32> to vector<32x128xf32>
    %38 = arith.addf %32, %37 : vector<32x128xf32>
    %39 = vector.extract_strided_slice %0 {offsets = [6, 0], sizes = [1, 128], strides = [1, 1]} : vector<8x128xi32> to vector<1x128xi32>
    %40 = vector.broadcast %39 : vector<1x128xi32> to vector<32x128xi32>
    %41 = arith.cmpi eq, %1, %40 : vector<32x128xi32>
    %42 = arith.extui %41 : vector<32x128xi1> to vector<32x128xi32>
    %43 = arith.sitofp %42 : vector<32x128xi32> to vector<32x128xf32>
    %44 = arith.addf %38, %43 : vector<32x128xf32>
    %45 = vector.extract_strided_slice %0 {offsets = [7, 0], sizes = [1, 128], strides = [1, 1]} : vector<8x128xi32> to vector<1x128xi32>
    %46 = vector.broadcast %45 : vector<1x128xi32> to vector<32x128xi32>
    %47 = arith.cmpi eq, %1, %46 : vector<32x128xi32>
    %48 = arith.extui %47 : vector<32x128xi1> to vector<32x128xi32>
    %49 = arith.sitofp %48 : vector<32x128xi32> to vector<32x128xf32>
    %50 = arith.addf %44, %49 : vector<32x128xf32>
    %c0_1 = arith.constant 0 : index
    %c0_2 = arith.constant 0 : index
    %51 = vector.load %arg2[%c0_1, %c0_2] : memref<16x32xbf16, #tpu.memory_space<vmem>>, vector<16x32xbf16>
    %52 = arith.extf %51 : vector<16x32xbf16> to vector<16x32xf32>
    %cst_3 = arith.constant dense<0.000000e+00> : vector<16x128xf32>
    %53 = tpu.matmul %52, %50, %cst_3 {dimension_numbers = #tpu.dot_dimension_numbers<[1], [0], [0], [1], [0, 0, 1, 1], [], []>} : vector<16x32xf32>, vector<32x128xf32>, vector<16x128xf32> -> vector<16x128xf32>
    %c0_4 = arith.constant 0 : index
    %c0_5 = arith.constant 0 : index
    %54 = vector.load %arg3[%c0_4, %c0_5] : memref<32x1xbf16, #tpu.memory_space<vmem>>, vector<32x1xbf16>
    %55 = arith.extf %54 : vector<32x1xbf16> to vector<32x1xf32>
    %56 = vector.broadcast %55 : vector<32x1xf32> to vector<32x128xf32>
    %57 = arith.mulf %56, %50 : vector<32x128xf32>
    %cst_6 = arith.constant dense<0.000000e+00> : vector<128xf32>
    %58 = vector.multi_reduction <add>, %57, %cst_6 [0] : vector<32x128xf32> to vector<128xf32>
    %59 = vector.shape_cast %58 : vector<128xf32> to vector<1x128xf32>
    %c0_7 = arith.constant 0 : index
    %c0_8 = arith.constant 0 : index
    %60 = vector.load %arg4[%c0_7, %c0_8] : memref<32x1xf32, #tpu.memory_space<vmem>>, vector<32x1xf32>
    %61 = vector.broadcast %60 : vector<32x1xf32> to vector<32x128xf32>
    %62 = arith.mulf %61, %50 : vector<32x128xf32>
    %cst_9 = arith.constant dense<0.000000e+00> : vector<128xf32>
    %63 = vector.multi_reduction <add>, %62, %cst_9 [0] : vector<32x128xf32> to vector<128xf32>
    %64 = vector.shape_cast %63 : vector<128xf32> to vector<1x128xf32>
    %65 = arith.mulf %53, %53 : vector<16x128xf32>
    %cst_10 = arith.constant dense<0.000000e+00> : vector<128xf32>
    %66 = vector.multi_reduction <add>, %65, %cst_10 [0] : vector<16x128xf32> to vector<128xf32>
    %67 = vector.shape_cast %66 : vector<128xf32> to vector<1x128xf32>
    %68 = arith.subf %67, %64 : vector<1x128xf32>
    %69 = arith.addf %59, %68 : vector<1x128xf32>
    %c0_11 = arith.constant 0 : index
    %c0_12 = arith.constant 0 : index
    %70 = vector.load %arg5[%c0_11, %c0_12] : memref<1x128xf32, #tpu.memory_space<vmem>>, vector<1x128xf32>
    tpu.vector_store %arg5[%c0_11, %c0_12], %69 {strides = array<i32>} : memref<1x128xf32, #tpu.memory_space<vmem>>, vector<1x128xf32>,
    return
  }
  func.func @transform_0(%arg0: i32) -> (i32, i32) {
    %c0_i32 = arith.constant 0 : i32
    %c0_i32_0 = arith.constant 0 : i32
    return %c0_i32, %arg0 : i32, i32
  }
  func.func @transform_1(%arg0: i32) -> (i32, i32) {
    %c0_i32 = arith.constant 0 : i32
    %c0_i32_0 = arith.constant 0 : i32
    %c0_i32_1 = arith.constant 0 : i32
    return %c0_i32, %c0_i32_0 : i32, i32
  }
  func.func @transform_2(%arg0: i32) -> (i32, i32) {
    %c0_i32 = arith.constant 0 : i32
    %c0_i32_0 = arith.constant 0 : i32
    %c0_i32_1 = arith.constant 0 : i32
    return %c0_i32, %c0_i32_0 : i32, i32
  }
  func.func @transform_3(%arg0: i32) -> (i32, i32) {
    %c0_i32 = arith.constant 0 : i32
    %c0_i32_0 = arith.constant 0 : i32
    %c0_i32_1 = arith.constant 0 : i32
    return %c0_i32, %c0_i32_0 : i32, i32
  }
  func.func @transform_4(%arg0: i32) -> (i32, i32) {
    %c0_i32 = arith.constant 0 : i32
    %c0_i32_0 = arith.constant 0 : i32
    return %c0_i32, %arg0 : i32, i32
  }
}

</mosaic_0001>

<llo_original>
// kernel: tpu_custom_call.1
$region0: #{tpu_custom_call.1}
  #allocation0 [shape = 'u32[]', space=smem, size = 0x4, offset = 0x4, fixed_abs, tag = 'smem constant byte address 0x4 - core index']
  #allocation1 [shape = 'u32[144,128]{1,0:T(1,128)}', space=vmem, size = 0x12000, scoped, tag = 'internal scratch']
  %s0 = inlined_call_operand.vmem [shape: s32[8,256], index: 0, kind: input, shape index: {}]
  %s1 = inlined_call_operand.vmem [shape: bf16[16,32], index: 1, kind: input, shape index: {}]
  %s2 = inlined_call_operand.vmem [shape: bf16[32,1], index: 2, kind: input, shape index: {}]
  %s3 = inlined_call_operand.vmem [shape: f32[32,1], index: 3, kind: input, shape index: {}]
  %s4 = inlined_call_operand.hbm [shape: f32[1,256], index: 4, kind: output, shape index: {}]
  %s5 = sld [smem:[#allocation0]]
  $region49: #{tpu_custom_call.1} parent=0
    _
  %s7 = ssub.s32 1, %s5
  %s8 = scalar_select 0, %s7, %s5
  $region1: #{tpu_custom_call.1} parent=0
    #allocation2 [shape = 'u8[1024]{0}', space=vmem, size = 0x400, scoped, tag = 'output window, operand 0']
    #allocation3 [shape = 's32[2]{0}', space=sflag, size = 0x8, scoped, tag = 'scoped memory for tpu_custom_call.1']
    %9 = vsyncpa [#allocation3], 0
    %s10 = scalar_lea.sflag [#allocation3], 1
    %11 = vsyncpa %s10, 0
    loop: start=0, step=1, limit=4
    $region2: #{tpu_custom_call.1} parent=1 // loop_pre_header
      _
    $region3: #{tpu_custom_call.1} parent=1 // loop_header
      %s13 = sphi 0, %s17
      %p14 = scmp.ge.s32.totalorder %s13, 4
      %s23 = sphi 0, %s25
      %s26 = sphi 0, %s23
      %s27 = sphi 0, %s26
      %s43 = sphi 0, %s27
      %s47 = sphi 0, %s47
      %s49 = sphi 0, %s47
      %s50 = sphi 0, %s49
      %s64 = sphi 0, %s50
      %s68 = sphi 0, %s68
      %s70 = sphi 0, %s68
      %s71 = sphi 0, %s70
      %s85 = sphi 0, %s71
      %s89 = sphi 0, %s89
      %s91 = sphi 0, %s89
      %s92 = sphi 0, %s91
      %s106 = sphi 0, %s92
      %s112 = sphi 0, %s114
      %s115 = sphi 0, %s112
      %s116 = sphi 0, %s115
      %s132 = sphi 0, %s116
    $region4: #{tpu_custom_call.1} parent=1 // loop_header_branch
      %16 = sbr.rel (%p14) target = $region8
    $region5: #{tpu_custom_call.1} parent=1 // loop_body
      %s18 = ssub.s32 %s13, 1
      %s19 = ssub.s32 %s13, 2
      %s20 = sadd.s32 %s13, 1
      %s21 = ssub.s32 %s13, %s20
      %p22 = scmp.eq.s32.totalorder %s21, 0
      %s24 = sadd.s32 %s23, 1
      %s25 = scalar_select %p22, %s23, %s24
      %p28 = pneg %p22
      %p29 = scmp.eq.s32.totalorder %s13, 1
      %p30 = por %p28, %p29
      %p31 = scmp.ne.s32.totalorder %s23, %s26
      %p32 = scmp.eq.s32.totalorder %s13, 0
      %p33 = por %p31, %p32
      %p34 = scmp.ne.s32.totalorder %s23, %s26
      %p35 = scmp.eq.s32.totalorder %s18, 1
      %p36 = por %p34, %p35
      %p37 = scmp.ne.s32.totalorder %s26, %s27
      %p38 = scmp.eq.s32.totalorder %s18, 0
      %p39 = por %p37, %p38
      %p40 = scmp.ne.s32.totalorder %s26, %s27
      %p41 = scmp.eq.s32.totalorder %s19, 1
      %p42 = por %p40, %p41
      %p44 = scmp.ne.s32.totalorder %s27, %s43
      %p45 = scmp.eq.s32.totalorder %s19, 0
      %p46 = por %p44, %p45
      %s48 = sadd.s32 %s47, 1
      %p51 = scmp.eq.s32.totalorder %s13, 1
      %p52 = scmp.ne.s32.totalorder %s47, %s49
      %p53 = scmp.eq.s32.totalorder %s13, 0
      %p54 = por %p52, %p53
      %p55 = scmp.ne.s32.totalorder %s47, %s49
      %p56 = scmp.eq.s32.totalorder %s18, 1
      %p57 = por %p55, %p56
      %p58 = scmp.ne.s32.totalorder %s49, %s50
      %p59 = scmp.eq.s32.totalorder %s18, 0
      %p60 = por %p58, %p59
      %p61 = scmp.ne.s32.totalorder %s49, %s50
      %p62 = scmp.eq.s32.totalorder %s19, 1
      %p63 = por %p61, %p62
      %p65 = scmp.ne.s32.totalorder %s50, %s64
      %p66 = scmp.eq.s32.totalorder %s19, 0
      %p67 = por %p65, %p66
      %s69 = sadd.s32 %s68, 1
      %p72 = scmp.eq.s32.totalorder %s13, 1
      %p73 = scmp.ne.s32.totalorder %s68, %s70
      %p74 = scmp.eq.s32.totalorder %s13, 0
      %p75 = por %p73, %p74
      %p76 = scmp.ne.s32.totalorder %s68, %s70
      %p77 = scmp.eq.s32.totalorder %s18, 1
      %p78 = por %p76, %p77
      %p79 = scmp.ne.s32.totalorder %s70, %s71
      %p80 = scmp.eq.s32.totalorder %s18, 0
      %p81 = por %p79, %p80
      %p82 = scmp.ne.s32.totalorder %s70, %s71
      %p83 = scmp.eq.s32.totalorder %s19, 1
      %p84 = por %p82, %p83
      %p86 = scmp.ne.s32.totalorder %s71, %s85
      %p87 = scmp.eq.s32.totalorder %s19, 0
      %p88 = por %p86, %p87
      %s90 = sadd.s32 %s89, 1
      %p93 = scmp.eq.s32.totalorder %s13, 1
      %p94 = scmp.ne.s32.totalorder %s89, %s91
      %p95 = scmp.eq.s32.totalorder %s13, 0
      %p96 = por %p94, %p95
      %p97 = scmp.ne.s32.totalorder %s89, %s91
      %p98 = scmp.eq.s32.totalorder %s18, 1
      %p99 = por %p97, %p98
      %p100 = scmp.ne.s32.totalorder %s91, %s92
      %p101 = scmp.eq.s32.totalorder %s18, 0
      %p102 = por %p100, %p101
      %p103 = scmp.ne.s32.totalorder %s91, %s92
      %p104 = scmp.eq.s32.totalorder %s19, 1
      %p105 = por %p103, %p104
      %p107 = scmp.ne.s32.totalorder %s92, %s106
      %p108 = scmp.eq.s32.totalorder %s19, 0
      %p109 = por %p107, %p108
      %s110 = ssub.s32 %s13, %s20
      %p111 = scmp.eq.s32.totalorder %s110, 0
      %s113 = sadd.s32 %s112, 1
      %s114 = scalar_select %p111, %s112, %s113
      %p117 = pneg %p111
      %p118 = scmp.eq.s32.totalorder %s13, 1
      %p119 = por %p117, %p118
      %p120 = scmp.ne.s32.totalorder %s112, %s115
      %p121 = scmp.eq.s32.totalorder %s13, 0
      %p122 = por %p120, %p121
      %p123 = scmp.ne.s32.totalorder %s112, %s115
      %p124 = scmp.eq.s32.totalorder %s18, 1
      %p125 = por %p123, %p124
      %p126 = scmp.ne.s32.totalorder %s115, %s116
      %p127 = scmp.eq.s32.totalorder %s18, 0
      %p128 = por %p126, %p127
      %p129 = scmp.ne.s32.totalorder %s115, %s116
      %p130 = scmp.eq.s32.totalorder %s19, 1
      %p131 = por %p129, %p130
      %p133 = scmp.ne.s32.totalorder %s116, %s132
      %p134 = scmp.eq.s32.totalorder %s19, 0
      %p135 = por %p133, %p134
      %p136 = scmp.le.s32.totalorder 1, %s13
      %p137 = scmp.lt.s32.totalorder %s13, 3
      %p138 = pnand %p136, %p137
      %p139 = pneg %p138
      // Predicated region
      $region9: #{tpu_custom_call.1} parent=5 // pred_check
        _
      $region10: #{tpu_custom_call.1} parent=5 // pred_check_branch
        %141 = sbr.rel (%p138) target = $region12
      $region11: #{tpu_custom_call.1} parent=5 // pred_region
        %s142 = ssub.s32 %s13, 1
        // Predicated region
        $region13: #{tpu_custom_call.1} parent=11 // pred_check
          %p143 = pneg %p60
        $region14: #{tpu_custom_call.1} parent=11 // pred_check_branch
          %145 = sbr.rel (%p143) target = $region16
        $region15: #{tpu_custom_call.1} parent=11 // pred_region
          _
        $region16: #{tpu_custom_call.1} parent=11 // pred_fallthru
          _
        // Predicated region
        $region17: #{tpu_custom_call.1} parent=11 // pred_check
          %p146 = pneg %p81
        $region18: #{tpu_custom_call.1} parent=11 // pred_check_branch
          %148 = sbr.rel (%p146) target = $region20
        $region19: #{tpu_custom_call.1} parent=11 // pred_region
          _
        $region20: #{tpu_custom_call.1} parent=11 // pred_fallthru
          _
        // Predicated region
        $region21: #{tpu_custom_call.1} parent=11 // pred_check
          %p149 = pneg %p102
        $region22: #{tpu_custom_call.1} parent=11 // pred_check_branch
          %151 = sbr.rel (%p149) target = $region24
        $region23: #{tpu_custom_call.1} parent=11 // pred_region
          _
        $region24: #{tpu_custom_call.1} parent=11 // pred_fallthru
          _
      $region12: #{tpu_custom_call.1} parent=5 // pred_fallthru
        _
      %p152 = scmp.lt.s32.totalorder %s13, 2
      // Predicated region
      $region25: #{tpu_custom_call.1} parent=5 // pred_check
        %p153 = pneg %p152
      $region26: #{tpu_custom_call.1} parent=5 // pred_check_branch
        %155 = sbr.rel (%p153) target = $region28
      $region27: #{tpu_custom_call.1} parent=5 // pred_region
        // Predicated region
        $region29: #{tpu_custom_call.1} parent=27 // pred_check
          %p156 = pneg %p33
        $region30: #{tpu_custom_call.1} parent=27 // pred_check_branch
          %158 = sbr.rel (%p156) target = $region32
        $region31: #{tpu_custom_call.1} parent=27 // pred_region
          %p159 = scmp.lt.s32.totalorder %s13, 1
          %s160 = scalar_select %p159, %s13, 1
          %s161 = smul.addr %s160, 8
          %s162 = scalar_lea.vmem %s0, %s161
        $region32: #{tpu_custom_call.1} parent=27 // pred_fallthru
          _
      $region28: #{tpu_custom_call.1} parent=5 // pred_fallthru
        _
      %p163 = scmp.le.s32.totalorder 1, %s13
      %p164 = scmp.lt.s32.totalorder %s13, 3
      %p165 = pnand %p163, %p164
      %p166 = pneg %p165
      // Predicated region
      $region33: #{tpu_custom_call.1} parent=5 // pred_check
        _
      $region34: #{tpu_custom_call.1} parent=5 // pred_check_branch
        %168 = sbr.rel (%p165) target = $region36
      $region35: #{tpu_custom_call.1} parent=5 // pred_region
        %s169 = ssub.s32 %s13, 1
        %p170 = scmp.lt.s32.totalorder %s18, 1
        %s171 = scalar_select %p170, %s18, 1
        %s172 = smul.addr %s171, 8
        %s173 = scalar_lea.vmem %s0, %s172
        %p174 = pneg %p39
        %p175 = pneg %p36
        %p176 = pneg %p60
        %p177 = pneg %p57
        %p178 = pneg %p81
        %p179 = pneg %p78
        %p180 = pneg %p102
        %p181 = pneg %p99
        %p182 = pneg %p128
        %p183 = pneg %p125
        %s184 = sand.u32 %s115, 1
        %s185 = scalar_lea.sflag [#allocation3], %s184
        %s186 = sand.u32 %s115, 1
        %s187 = scalar_lea.vmem [#allocation2], %s186
        %p188 = scmp.lt.s32.totalorder %s18, 1
        %s189 = scalar_select %p188, %s18, 1
        %s190 = smul.addr %s189, 8
        %s191 = scalar_lea.vmem %s0, %s190
        %v192 = vld [vmem:[%s191] sm:$0xff]
        %v193 = vlaneseq
        %v194 = vshrl.u32 %v193, 7
        %v195 = vadd.s32 %v194, 8
        %v196 = vadd.s32 %v194, 16
        %v197 = vadd.s32 %v194, 24
        %v198 = vlaneseq
        %v199 = vshrl.u32 %v198, 7
        %v200 = vsub.s32 0, %v199
        %v201 = vrot.slane %v192, %v200
        %vm202 = vcmp.eq.s32.totalorder %v194, %v201
        %vm203 = vcmp.eq.s32.totalorder %v195, %v201
        %vm204 = vcmp.eq.s32.totalorder %v196, %v201
        %vm205 = vcmp.eq.s32.totalorder %v197, %v201
        %v206 = vsel %vm202, 1, 0
        %v207 = vsel %vm203, 1, 0
        %v208 = vsel %vm204, 1, 0
        %v209 = vsel %vm205, 1, 0
        %v210 = vcvt.s32.f32 %v206
        %v211 = vcvt.s32.f32 %v207
        %v212 = vcvt.s32.f32 %v208
        %v213 = vcvt.s32.f32 %v209
        %v214 = vadd.f32 %v210, 0.0
        %v215 = vadd.f32 %v211, 0.0
        %v216 = vadd.f32 %v212, 0.0
        %v217 = vadd.f32 %v213, 0.0
        %v218 = vlaneseq
        %v219 = vshrl.u32 %v218, 7
        %v220 = vsub.s32 1, %v219
        %v221 = vrot.slane %v192, %v220
        %vm222 = vcmp.eq.s32.totalorder %v194, %v221
        %vm223 = vcmp.eq.s32.totalorder %v195, %v221
        %vm224 = vcmp.eq.s32.totalorder %v196, %v221
        %vm225 = vcmp.eq.s32.totalorder %v197, %v221
        %v226 = vsel %vm222, 1, 0
        %v227 = vsel %vm223, 1, 0
        %v228 = vsel %vm224, 1, 0
        %v229 = vsel %vm225, 1, 0
        %v230 = vcvt.s32.f32 %v226
        %v231 = vcvt.s32.f32 %v227
        %v232 = vcvt.s32.f32 %v228
        %v233 = vcvt.s32.f32 %v229
        %v234 = vadd.f32 %v214, %v230
        %v235 = vadd.f32 %v215, %v231
        %v236 = vadd.f32 %v216, %v232
        %v237 = vadd.f32 %v217, %v233
        %v238 = vlaneseq
        %v239 = vshrl.u32 %v238, 7
        %v240 = vsub.s32 2, %v239
        %v241 = vrot.slane %v192, %v240
        %vm242 = vcmp.eq.s32.totalorder %v194, %v241
        %vm243 = vcmp.eq.s32.totalorder %v195, %v241
        %vm244 = vcmp.eq.s32.totalorder %v196, %v241
        %vm245 = vcmp.eq.s32.totalorder %v197, %v241
        %v246 = vsel %vm242, 1, 0
        %v247 = vsel %vm243, 1, 0
        %v248 = vsel %vm244, 1, 0
        %v249 = vsel %vm245, 1, 0
        %v250 = vcvt.s32.f32 %v246
        %v251 = vcvt.s32.f32 %v247
        %v252 = vcvt.s32.f32 %v248
        %v253 = vcvt.s32.f32 %v249
        %v254 = vadd.f32 %v234, %v250
        %v255 = vadd.f32 %v235, %v251
        %v256 = vadd.f32 %v236, %v252
        %v257 = vadd.f32 %v237, %v253
        %v258 = vlaneseq
        %v259 = vshrl.u32 %v258, 7
        %v260 = vsub.s32 3, %v259
        %v261 = vrot.slane %v192, %v260
        %vm262 = vcmp.eq.s32.totalorder %v194, %v261
        %vm263 = vcmp.eq.s32.totalorder %v195, %v261
        %vm264 = vcmp.eq.s32.totalorder %v196, %v261
        %vm265 = vcmp.eq.s32.totalorder %v197, %v261
        %v266 = vsel %vm262, 1, 0
        %v267 = vsel %vm263, 1, 0
        %v268 = vsel %vm264, 1, 0
        %v269 = vsel %vm265, 1, 0
        %v270 = vcvt.s32.f32 %v266
        %v271 = vcvt.s32.f32 %v267
        %v272 = vcvt.s32.f32 %v268
        %v273 = vcvt.s32.f32 %v269
        %v274 = vadd.f32 %v254, %v270
        %v275 = vadd.f32 %v255, %v271
        %v276 = vadd.f32 %v256, %v272
        %v277 = vadd.f32 %v257, %v273
        %v278 = vlaneseq
        %v279 = vshrl.u32 %v278, 7
        %v280 = vsub.s32 4, %v279
        %v281 = vrot.slane %v192, %v280
        %vm282 = vcmp.eq.s32.totalorder %v194, %v281
        %vm283 = vcmp.eq.s32.totalorder %v195, %v281
        %vm284 = vcmp.eq.s32.totalorder %v196, %v281
        %vm285 = vcmp.eq.s32.totalorder %v197, %v281
        %v286 = vsel %vm282, 1, 0
        %v287 = vsel %vm283, 1, 0
        %v288 = vsel %vm284, 1, 0
        %v289 = vsel %vm285, 1, 0
        %v290 = vcvt.s32.f32 %v286
        %v291 = vcvt.s32.f32 %v287
        %v292 = vcvt.s32.f32 %v288
        %v293 = vcvt.s32.f32 %v289
        %v294 = vadd.f32 %v274, %v290
        %v295 = vadd.f32 %v275, %v291
        %v296 = vadd.f32 %v276, %v292
        %v297 = vadd.f32 %v277, %v293
        %v298 = vlaneseq
        %v299 = vshrl.u32 %v298, 7
        %v300 = vsub.s32 5, %v299
        %v301 = vrot.slane %v192, %v300
        %vm302 = vcmp.eq.s32.totalorder %v194, %v301
        %vm303 = vcmp.eq.s32.totalorder %v195, %v301
        %vm304 = vcmp.eq.s32.totalorder %v196, %v301
        %vm305 = vcmp.eq.s32.totalorder %v197, %v301
        %v306 = vsel %vm302, 1, 0
        %v307 = vsel %vm303, 1, 0
        %v308 = vsel %vm304, 1, 0
        %v309 = vsel %vm305, 1, 0
        %v310 = vcvt.s32.f32 %v306
        %v311 = vcvt.s32.f32 %v307
        %v312 = vcvt.s32.f32 %v308
        %v313 = vcvt.s32.f32 %v309
        %v314 = vadd.f32 %v294, %v310
        %v315 = vadd.f32 %v295, %v311
        %v316 = vadd.f32 %v296, %v312
        %v317 = vadd.f32 %v297, %v313
        %v318 = vlaneseq
        %v319 = vshrl.u32 %v318, 7
        %v320 = vsub.s32 6, %v319
        %v321 = vrot.slane %v192, %v320
        %vm322 = vcmp.eq.s32.totalorder %v194, %v321
        %vm323 = vcmp.eq.s32.totalorder %v195, %v321
        %vm324 = vcmp.eq.s32.totalorder %v196, %v321
        %vm325 = vcmp.eq.s32.totalorder %v197, %v321
        %v326 = vsel %vm322, 1, 0
        %v327 = vsel %vm323, 1, 0
        %v328 = vsel %vm324, 1, 0
        %v329 = vsel %vm325, 1, 0
        %v330 = vcvt.s32.f32 %v326
        %v331 = vcvt.s32.f32 %v327
        %v332 = vcvt.s32.f32 %v328
        %v333 = vcvt.s32.f32 %v329
        %v334 = vadd.f32 %v314, %v330
        %v335 = vadd.f32 %v315, %v331
        %v336 = vadd.f32 %v316, %v332
        %v337 = vadd.f32 %v317, %v333
        %v338 = vlaneseq
        %v339 = vshrl.u32 %v338, 7
        %v340 = vsub.s32 7, %v339
        %v341 = vrot.slane %v192, %v340
        %vm342 = vcmp.eq.s32.totalorder %v194, %v341
        %vm343 = vcmp.eq.s32.totalorder %v195, %v341
        %vm344 = vcmp.eq.s32.totalorder %v196, %v341
        %vm345 = vcmp.eq.s32.totalorder %v197, %v341
        %v346 = vsel %vm342, 1, 0
        %v347 = vsel %vm343, 1, 0
        %v348 = vsel %vm344, 1, 0
        %v349 = vsel %vm345, 1, 0
        %v350 = vcvt.s32.f32 %v346
        %v351 = vcvt.s32.f32 %v347
        %v352 = vcvt.s32.f32 %v348
        %v353 = vcvt.s32.f32 %v349
        %v354 = vadd.f32 %v334, %v350
        %v355 = vadd.f32 %v335, %v351
        %v356 = vadd.f32 %v336, %v352
        %v357 = vadd.f32 %v337, %v353
        %v358 = vld [vmem:[%s1] sm:$0xf]
        %v359 = vld [vmem:[%s1 + $0x4] sm:$0xf]
        %v360 = vunpack.c.l.bf16 %v358
        %v361 = vunpack.c.l.bf16 %v359
        %vm362 = vcmask 261120
        %v364 = vsel %vm362, %v360, 0
        %v367 = vsel %vm362, %v361, 0
        %369 = vmatprep.subr.mxu0 0.0
        %370 = vmatpush1.msra.mxu0 %v354
        %371 = vmatprep.subr.mxu0 0.0
        %372 = vmatpush1.msra.mxu0 %v355
        %373 = vmatprep.subr.mxu0 0.0
        %374 = vmatpush1.msra.mxu0 %v356
        %375 = vmatprep.subr.mxu0 0.0
        %376 = vmatpush1.msra.mxu0 %v357
        %377 = vmatprep.subr.mxu0 0.0
        %378 = vmatpush1.msra.mxu0 0.0
        %379 = vmatprep.subr.mxu0 0.0
        %380 = vmatpush1.msra.mxu0 0.0
        %381 = vmatprep.subr.mxu0 0.0
        %382 = vmatpush1.msra.mxu0 0.0
        %383 = vmatprep.subr.mxu0 0.0
        %384 = vmatpush1.msra.mxu0 0.0
        %385 = vmatprep.subr.mxu0 0.0
        %386 = vmatpush1.msra.mxu0 0.0
        %387 = vmatprep.subr.mxu0 0.0
        %388 = vmatpush1.msra.mxu0 0.0
        %389 = vmatprep.subr.mxu0 0.0
        %390 = vmatpush1.msra.mxu0 0.0
        %391 = vmatprep.subr.mxu0 0.0
        %392 = vmatpush1.msra.mxu0 0.0
        %393 = vmatprep.subr.mxu0 0.0
        %394 = vmatpush1.msra.mxu0 0.0
        %395 = vmatprep.subr.mxu0 0.0
        %396 = vmatpush1.msra.mxu0 0.0
        %397 = vmatprep.subr.mxu0 0.0
        %398 = vmatpush1.msra.mxu0 0.0
        %399 = vmatprep.subr.mxu0 0.0
        %400 = vmatpush1.msra.mxu0 0.0
        %401 = vmatprep.subr.mxu0 0.0
        %402 = vmatpush1.msra.mxu0 0.0
        %403 = vmatprep.subr.mxu0 0.0
        %404 = vmatpush1.msra.mxu0 0.0
        %405 = vmatprep.subr.mxu0 0.0
        %406 = vmatpush1.msra.mxu0 0.0
        %407 = vmatprep.subr.mxu0 0.0
        %408 = vmatpush1.msra.mxu0 0.0
        %409 = vmatprep.subr.mxu0 0.0
        %410 = vmatpush1.msra.mxu0 0.0
        %411 = vmatprep.subr.mxu0 0.0
        %412 = vmatpush1.msra.mxu0 0.0
        %413 = vmatprep.subr.mxu0 0.0
        %414 = vmatpush1.msra.mxu0 0.0
        %415 = vmatprep.subr.mxu0 0.0
        %416 = vmatpush1.msra.mxu0 0.0
        %417 = vmatprep.subr.mxu0 0.0
        %418 = vmatpush1.msra.mxu0 0.0
        %419 = vmatprep.subr.mxu0 0.0
        %420 = vmatpush1.msra.mxu0 0.0
        %421 = vmatprep.subr.mxu0 0.0
        %422 = vmatpush1.msra.mxu0 0.0
        %423 = vmatprep.subr.mxu0 0.0
        %424 = vmatpush1.msra.mxu0 0.0
        %425 = vmatprep.subr.mxu0 0.0
        %426 = vmatpush1.msra.mxu0 0.0
        %427 = vmatprep.subr.mxu0 0.0
        %428 = vmatpush1.msra.mxu0 0.0
        %429 = vmatprep.subr.mxu0 0.0
        %430 = vmatpush1.msra.mxu0 0.0
        %431 = vmatprep.subr.mxu0 0.0
        %432 = vmatpush1.msra.mxu0 0.0
        %433 = vmatprep.mubr.f32.mxu0 0.0
        %434 = vmatmul.mubr.f32.gmra.mrb[0].mxu0 %v364
        %v435 = vpop.f32.mrb[0].mxu0
        %v436 = vadd.f32 0.0, %v435
        %v437 = vpop.f32.mrb[0].mxu0
        %438 = vmatprep.mubr.f32.mxu0 0.0
        %439 = vmatmul.mubr.f32.gmra.mrb[0].mxu0 %v367
        %v440 = vpop.f32.mrb[0].mxu0
        %v441 = vadd.f32 0.0, %v440
        %v442 = vpop.f32.mrb[0].mxu0
        %443 = vdwg.mxu0
        %v444 = vld [vmem:[%s2] sm:$0xf]
        %v445 = vld [vmem:[%s2 + $0x4] sm:$0xf]
        %v446 = vld [vmem:[%s2 + $0x8] sm:$0xf]
        %v447 = vld [vmem:[%s2 + $0xc] sm:$0xf]
        %v448 = vunpack.c.l.bf16 %v444
        %v449 = vunpack.c.l.bf16 %v445
        %v450 = vunpack.c.l.bf16 %v446
        %v451 = vunpack.c.l.bf16 %v447
        %453 = vset.pattern.permute.xlu0 0
        %454 = vperm.xlu0 %453, %v448
        %v455 = vpop.permute.xlu0 %454
        %458 = vset.pattern.permute.xlu0 0
        %459 = vperm.xlu0 %458, %v449
        %v460 = vpop.permute.xlu0 %459
        %463 = vset.pattern.permute.xlu0 0
        %464 = vperm.xlu0 %463, %v450
        %v465 = vpop.permute.xlu0 %464
        %468 = vset.pattern.permute.xlu0 0
        %469 = vperm.xlu0 %468, %v451
        %v470 = vpop.permute.xlu0 %469
        %v472 = vmul.f32 %v455, %v354
        %v473 = vmul.f32 %v460, %v355
        %v474 = vmul.f32 %v465, %v356
        %v475 = vmul.f32 %v470, %v357
        %v476 = vadd.f32 %v472, %v473
        %v477 = vadd.f32 %v476, %v474
        %v478 = vadd.f32 %v477, %v475
        %v479 = vrot.slane %v478, 4
        %v480 = vadd.f32 %v478, %v479
        %v481 = vrot.slane %v480, 2
        %v482 = vadd.f32 %v480, %v481
        %v483 = vrot.slane %v482, 1
        %v484 = vadd.f32 %v482, %v483
        %v485 = vld [vmem:[%s3] sm:$0xff]
        %v486 = vld [vmem:[%s3 + $0x8] sm:$0xff]
        %v487 = vld [vmem:[%s3 + $0x10] sm:$0xff]
        %v488 = vld [vmem:[%s3 + $0x18] sm:$0xff]
        %490 = vset.pattern.permute.xlu0 0
        %491 = vperm.xlu0 %490, %v485
        %v492 = vpop.permute.xlu0 %491
        %495 = vset.pattern.permute.xlu0 0
        %496 = vperm.xlu0 %495, %v486
        %v497 = vpop.permute.xlu0 %496
        %500 = vset.pattern.permute.xlu0 0
        %501 = vperm.xlu0 %500, %v487
        %v502 = vpop.permute.xlu0 %501
        %505 = vset.pattern.permute.xlu0 0
        %506 = vperm.xlu0 %505, %v488
        %v507 = vpop.permute.xlu0 %506
        %v509 = vmul.f32 %v492, %v354
        %v510 = vmul.f32 %v497, %v355
        %v511 = vmul.f32 %v502, %v356
        %v512 = vmul.f32 %v507, %v357
        %v513 = vadd.f32 %v509, %v510
        %v514 = vadd.f32 %v513, %v511
        %v515 = vadd.f32 %v514, %v512
        %v516 = vrot.slane %v515, 4
        %v517 = vadd.f32 %v515, %v516
        %v518 = vrot.slane %v517, 2
        %v519 = vadd.f32 %v517, %v518
        %v520 = vrot.slane %v519, 1
        %v521 = vadd.f32 %v519, %v520
        %v522 = vmul.f32 %v436, %v436
        %v523 = vmul.f32 %v441, %v441
        %v524 = vadd.f32 %v522, %v523
        %v525 = vrot.slane %v524, 4
        %v526 = vadd.f32 %v524, %v525
        %v527 = vrot.slane %v526, 2
        %v528 = vadd.f32 %v526, %v527
        %v529 = vrot.slane %v528, 1
        %v530 = vadd.f32 %v528, %v529
        %v531 = vsub.f32 %v530, %v521
        %v532 = vadd.f32 %v484, %v531
        %533 = vst [vmem:[%s187] sm:$0x1] %v532
        %s534 = sand.u32 %s115, 1
        %s535 = scalar_lea.sflag [#allocation3], %s534
        %s536 = sand.u32 %s115, 1
        %s537 = scalar_lea.vmem [#allocation2], %s536
        // Predicated region
        $region37: #{tpu_custom_call.1} parent=35 // pred_check
          %p538 = pneg %p125
        $region38: #{tpu_custom_call.1} parent=35 // pred_check_branch
          %540 = sbr.rel (%p538) target = $region40
        $region39: #{tpu_custom_call.1} parent=35 // pred_region
          %s542 = ssub.s32 16, 16
          %543 = vsyncadd %s535, %s542
          %s544 = smul.addr %s18, 16
          %s545 = scalar_lea.hbm %s4, %s544
          %s547 = sshll.u32 %s537, 4
          %s548 = int_to_ptr.vmem [resolvable:$true] %s547
          %550 = dma.vmem_to_hbm [thread:$0]  %s548, 16, %s545, %s535
        $region40: #{tpu_custom_call.1} parent=35 // pred_fallthru
          _
      $region36: #{tpu_custom_call.1} parent=5 // pred_fallthru
        _
      %p551 = scmp.le.s32.totalorder 2, %s13
      // Predicated region
      $region41: #{tpu_custom_call.1} parent=5 // pred_check
        %p552 = pneg %p551
      $region42: #{tpu_custom_call.1} parent=5 // pred_check_branch
        %554 = sbr.rel (%p552) target = $region44
      $region43: #{tpu_custom_call.1} parent=5 // pred_region
        %s555 = ssub.s32 %s13, 2
        // Predicated region
        $region45: #{tpu_custom_call.1} parent=43 // pred_check
          %p556 = pneg %p131
        $region46: #{tpu_custom_call.1} parent=43 // pred_check_branch
          %558 = sbr.rel (%p556) target = $region48
        $region47: #{tpu_custom_call.1} parent=43 // pred_region
          %s559 = sand.u32 %s116, 1
          %s560 = scalar_lea.sflag [#allocation3], %s559
          %s561 = sand.u32 %s116, 1
          %s562 = scalar_lea.vmem [#allocation2], %s561
          %563 = dma.done %s560, 16
        $region48: #{tpu_custom_call.1} parent=43 // pred_fallthru
          _
      $region44: #{tpu_custom_call.1} parent=5 // pred_fallthru
        _
    $region6: #{tpu_custom_call.1} parent=1 // loop_footer
      %s17 = sadd.s32 1, %s13
    $region7: #{tpu_custom_call.1} parent=1 // loop_footer_branch
      %12 = sbr.rel target = $region3
    $region8: #{tpu_custom_call.1} parent=1 // loop_exit
      _
    %564 = vsyncpa [#allocation3], 1
    %s565 = scalar_lea.sflag [#allocation3], 1
    %566 = vsyncpa %s565, 1

</llo_original>
